<compile_context>
chip_gen: v5e
topology: v5e:2x2
jax: 0.10.0
libtpu: 0.0.40
codegen_flags: <defaults>
</compile_context>

<pallas_src>
import jax
import jax.numpy as jnp
from jax.experimental import pallas as pl
from jax.experimental.pallas import tpu as pltpu


def mlp_kernel(x_ref, w1_ref, b1_ref, w2_ref, b2_ref, o_ref):
    # Hidden layer: (TM, in_size) @ (in_size, hidden) + (1, hidden) -> ReLU
    h = jnp.dot(x_ref[...], w1_ref[...], preferred_element_type=jnp.float32)
    h = jnp.maximum(h + b1_ref[...], 0.0)
    # Output layer: (TM, hidden) @ (hidden, out_size) + (1, out_size)
    y = jnp.dot(h, w2_ref[...], preferred_element_type=jnp.float32)
    o_ref[...] = (y + b2_ref[...]).astype(o_ref.dtype)


def _round_up(x, m):
    return ((x + m - 1) // m) * m


def neuralnet_forward(x, w1, b1, w2, b2, *, tm=2048):
    """Forward pass of NeuralNet: Linear(in,32) -> ReLU -> Linear(32,out).

    Batched over N with row-tile `tm`; weights stay resident in VMEM while x and
    the output stream through double-buffered VMEM tiles.
    """
    n, in_size = x.shape
    hidden = w1.shape[1]
    out_size = w2.shape[1]
    dtype = x.dtype

    # Accept torch-style 1-D biases as well as (1, dim) biases.
    b1 = jnp.reshape(b1, (1, hidden))
    b2 = jnp.reshape(b2, (1, out_size))

    if n == 0:
        return jnp.zeros((0, out_size), dtype)

    # Row tiling over the batch dimension:
    #   * multiple of 8 (f32 sublane rule),
    #   * capped so the grid has >= 2 steps when n > 8 (lets v7x's two TensorCores
    #     split the "parallel" batch axis; harmless on 1-TC v5e/v6e).
    tm = max(8, min(tm, _round_up(pl.cdiv(n, 2), 8)))
    grid = (pl.cdiv(n, tm),)

    itemsize = jnp.dtype(dtype).itemsize
    flops = 2 * n * (in_size * hidden + hidden * out_size)
    bytes_accessed = itemsize * (
        n * in_size                      # x stream
        + in_size * hidden + hidden      # W1, b1 (VMEM-resident, counted once)
        + hidden * out_size + out_size   # W2, b2
        + n * out_size                   # output stream
    )

    out = pl.pallas_call(
        mlp_kernel,
        out_shape=jax.ShapeDtypeStruct((n, out_size), dtype),
        grid=grid,
        in_specs=[
            # x: streamed per row-tile; ragged final block is handled by Pallas
            # (in_size equals the full last dim, so the (8,128) rule is satisfied).
            pl.BlockSpec((tm, in_size), lambda i: (i, 0)),
            # Weights / biases: grid-invariant -> VMEM-resident across the loop.
            pl.BlockSpec((in_size, hidden), lambda i: (0, 0)),
            pl.BlockSpec((1, hidden), lambda i: (0, 0)),
            pl.BlockSpec((hidden, out_size), lambda i: (0, 0)),
            pl.BlockSpec((1, out_size), lambda i: (0, 0)),
        ],
        # Compact output: last dim equals the full array dim (no 128-lane padding),
        # so writeback traffic is exactly n * out_size * itemsize bytes.
        out_specs=pl.BlockSpec((tm, out_size), lambda i: (i, 0)),
        compiler_params=pltpu.CompilerParams(
            dimension_semantics=("parallel",)),
        cost_estimate=pl.CostEstimate(
            flops=flops, transcendentals=0, bytes_accessed=bytes_accessed),
    )(x, w1, b1, w2, b2)

    return out


def init_params(key, in_size, hidden, out_size, dtype=jnp.float32):
    """Deterministic init mimicking torch.nn.Linear (uniform +-1/sqrt(fan_in))."""
    k1, k2, k3, k4 = jax.random.split(key, 4)
    bound1 = 1.0 / jnp.sqrt(in_size)
    bound2 = 1.0 / jnp.sqrt(hidden)
    w1 = jax.random.uniform(k1, (in_size, hidden), dtype, -bound1, bound1)
    b1 = jax.random.uniform(k2, (1, hidden), dtype, -bound1, bound1)
    w2 = jax.random.uniform(k3, (hidden, out_size), dtype, -bound2, bound2)
    b2 = jax.random.uniform(k4, (1, out_size), dtype, -bound2, bound2)
    return w1, b1, w2, b2


def _ref_forward(x, w1, b1, w2, b2):
    return jnp.maximum(x @ w1 + b1.reshape(1, -1), 0.0) @ w2 + b2.reshape(1, -1)


if __name__ == "__main__":
    key = jax.random.PRNGKey(0)
    k_x, k_p, k_x2 = jax.random.split(key, 3)

    IN_SIZE, HIDDEN, OUT_SIZE = 64, 32, 4
    w1, b1, w2, b2 = init_params(k_p, IN_SIZE, HIDDEN, OUT_SIZE)

    # Batched case: tm clamps to 256 so the grid has 2 steps (v7x megacore-friendly).
    N = 512
    x = jax.random.normal(k_x, (N, IN_SIZE), jnp.float32)
    y = jax.block_until_ready(neuralnet_forward(x, w1, b1, w2, b2))
    ref = _ref_forward(x, w1, b1, w2, b2)
    assert y.shape == (N, OUT_SIZE)
    assert jnp.allclose(y, ref, atol=1e-5, rtol=1e-5)

    # Ragged batch case: exercises the masked final block (no wrapper-side padding).
    N2 = 100
    x2 = jax.random.normal(k_x2, (N2, IN_SIZE), jnp.float32)
    y2 = jax.block_until_ready(neuralnet_forward(x2, w1, b1, w2, b2))
    ref2 = _ref_forward(x2, w1, b1, w2, b2)
    assert y2.shape == (N2, OUT_SIZE)
    assert jnp.allclose(y2, ref2, atol=1e-5, rtol=1e-5)

    # 1-D (torch-style) bias robustness check.
    y3 = jax.block_until_ready(
        neuralnet_forward(x2, w1, b1.reshape(-1), w2, b2.reshape(-1)))
    assert jnp.allclose(y3, ref2, atol=1e-5, rtol=1e-5)

    # TODO(synk): step()/optimizer (SGD+momentum training, loss_fn) is host-side
    # training logic with no forward-kernel equivalent; only forward() is implemented.
    print("KERNEL_OK")
</pallas_src>

<mosaic_0001>
module attributes {stable_mosaic.version = 11 : i64} {
  func.func @mlp_kernel(%arg0: i32, %arg1: memref<256x64xf32, #tpu.memory_space<vmem>>, %arg2: memref<64x32xf32, #tpu.memory_space<vmem>>, %arg3: memref<1x32xf32, #tpu.memory_space<vmem>>, %arg4: memref<32x4xf32, #tpu.memory_space<vmem>>, %arg5: memref<1x4xf32, #tpu.memory_space<vmem>>, %arg6: memref<256x4xf32, #tpu.memory_space<vmem>>) attributes {dimension_semantics = [#tpu.dimension_semantics<parallel>], iteration_bounds = array<i64: 2>, scalar_prefetch = 0 : i64, scratch_operands = 0 : i64, tpu.core_type = #tpu.core_type<tc>, window_params = [{transform_indices = @transform_0, window_bounds = array<i64: 256, 64>}, {pipeline_mode = #tpu.pipeline_mode<synchronous>, transform_indices = @transform_1, window_bounds = array<i64: 64, 32>}, {pipeline_mode = #tpu.pipeline_mode<synchronous>, transform_indices = @transform_2, window_bounds = array<i64: 1, 32>}, {pipeline_mode = #tpu.pipeline_mode<synchronous>, transform_indices = @transform_3, window_bounds = array<i64: 32, 4>}, {pipeline_mode = #tpu.pipeline_mode<synchronous>, transform_indices = @transform_4, window_bounds = array<i64: 1, 4>}, {transform_indices = @transform_5, window_bounds = array<i64: 256, 4>}]} {
    %c0 = arith.constant 0 : index
    %c0_0 = arith.constant 0 : index
    %0 = vector.load %arg1[%c0, %c0_0] : memref<256x64xf32, #tpu.memory_space<vmem>>, vector<256x64xf32>
    %c0_1 = arith.constant 0 : index
    %c0_2 = arith.constant 0 : index
    %1 = vector.load %arg2[%c0_1, %c0_2] : memref<64x32xf32, #tpu.memory_space<vmem>>, vector<64x32xf32>
    %cst = arith.constant dense<0.000000e+00> : vector<256x32xf32>
    %2 = tpu.matmul %0, %1, %cst {dimension_numbers = #tpu.dot_dimension_numbers<[1], [0], [0], [1], [0, 0, 1, 1], [], []>} : vector<256x64xf32>, vector<64x32xf32>, vector<256x32xf32> -> vector<256x32xf32>
    %c0_3 = arith.constant 0 : index
    %c0_4 = arith.constant 0 : index
    %3 = vector.load %arg3[%c0_3, %c0_4] : memref<1x32xf32, #tpu.memory_space<vmem>>, vector<1x32xf32>
    %4 = vector.broadcast %3 : vector<1x32xf32> to vector<256x32xf32>
    %5 = arith.addf %2, %4 : vector<256x32xf32>
    %cst_5 = arith.constant 0.000000e+00 : f32
    %6 = vector.broadcast %cst_5 : f32 to vector<256x32xf32>
    %7 = arith.maximumf %5, %6 : vector<256x32xf32>
    %c0_6 = arith.constant 0 : index
    %c0_7 = arith.constant 0 : index
    %8 = vector.load %arg4[%c0_6, %c0_7] : memref<32x4xf32, #tpu.memory_space<vmem>>, vector<32x4xf32>
    %cst_8 = arith.constant dense<0.000000e+00> : vector<256x4xf32>
    %9 = tpu.matmul %7, %8, %cst_8 {dimension_numbers = #tpu.dot_dimension_numbers<[1], [0], [0], [1], [0, 0, 1, 1], [], []>} : vector<256x32xf32>, vector<32x4xf32>, vector<256x4xf32> -> vector<256x4xf32>
    %c0_9 = arith.constant 0 : index
    %c0_10 = arith.constant 0 : index
    %10 = vector.load %arg5[%c0_9, %c0_10] : memref<1x4xf32, #tpu.memory_space<vmem>>, vector<1x4xf32>
    %11 = vector.broadcast %10 : vector<1x4xf32> to vector<256x4xf32>
    %12 = arith.addf %9, %11 : vector<256x4xf32>
    %c0_11 = arith.constant 0 : index
    %c0_12 = arith.constant 0 : index
    %13 = vector.load %arg6[%c0_11, %c0_12] : memref<256x4xf32, #tpu.memory_space<vmem>>, vector<256x4xf32>
    tpu.vector_store %arg6[%c0_11, %c0_12], %12 {strides = array<i32>} : memref<256x4xf32, #tpu.memory_space<vmem>>, vector<256x4xf32>,
    return
  }
  func.func @transform_0(%arg0: i32) -> (i32, i32) {
    %c0_i32 = arith.constant 0 : i32
    %c0_i32_0 = arith.constant 0 : i32
    return %arg0, %c0_i32 : i32, i32
  }
  func.func @transform_1(%arg0: i32) -> (i32, i32) {
    %c0_i32 = arith.constant 0 : i32
    %c0_i32_0 = arith.constant 0 : i32
    %c0_i32_1 = arith.constant 0 : i32
    return %c0_i32, %c0_i32_0 : i32, i32
  }
  func.func @transform_2(%arg0: i32) -> (i32, i32) {
    %c0_i32 = arith.constant 0 : i32
    %c0_i32_0 = arith.constant 0 : i32
    %c0_i32_1 = arith.constant 0 : i32
    return %c0_i32, %c0_i32_0 : i32, i32
  }
  func.func @transform_3(%arg0: i32) -> (i32, i32) {
    %c0_i32 = arith.constant 0 : i32
    %c0_i32_0 = arith.constant 0 : i32
    %c0_i32_1 = arith.constant 0 : i32
    return %c0_i32, %c0_i32_0 : i32, i32
  }
  func.func @transform_4(%arg0: i32) -> (i32, i32) {
    %c0_i32 = arith.constant 0 : i32
    %c0_i32_0 = arith.constant 0 : i32
    %c0_i32_1 = arith.constant 0 : i32
    return %c0_i32, %c0_i32_0 : i32, i32
  }
  func.func @transform_5(%arg0: i32) -> (i32, i32) {
    %c0_i32 = arith.constant 0 : i32
    %c0_i32_0 = arith.constant 0 : i32
    return %arg0, %c0_i32 : i32, i32
  }
}

</mosaic_0001>

<llo_original>
// kernel: tpu_custom_call.1
$region0: #{tpu_custom_call.1}
  #allocation0 [shape = 'u32[]', space=smem, size = 0x4, offset = 0x4, fixed_abs, tag = 'smem constant byte address 0x4 - core index']
  #allocation1 [shape = 'u32[72,128]{1,0:T(1,128)}', space=vmem, size = 0x9000, scoped, tag = 'internal scratch']
  %s0 = inlined_call_operand.vmem [shape: f32[512,64], index: 0, kind: input, shape index: {}]
  %s1 = inlined_call_operand.vmem [shape: f32[64,32], index: 1, kind: input, shape index: {}]
  %s2 = inlined_call_operand.vmem [shape: f32[1,32], index: 2, kind: input, shape index: {}]
  %s3 = inlined_call_operand.vmem [shape: f32[32,4], index: 3, kind: input, shape index: {}]
  %s4 = inlined_call_operand.vmem [shape: f32[1,4], index: 4, kind: input, shape index: {}]
  %s5 = inlined_call_operand.vmem [shape: f32[512,4], index: 5, kind: output, shape index: {}]
  %s6 = sld [smem:[#allocation0]]
  $region53: #{tpu_custom_call.1} parent=0
    _
  %s8 = ssub.s32 1, %s6
  %s9 = scalar_select 0, %s8, %s6
  loop: start=0, step=1, limit=4
  $region2: #{tpu_custom_call.1} parent=0 // loop_pre_header
    _
  $region3: #{tpu_custom_call.1} parent=0 // loop_header
    %s11 = sphi 0, %s15
    %p12 = scmp.ge.s32.totalorder %s11, 4
    %s21 = sphi 0, %s23
    %s24 = sphi 0, %s21
    %s25 = sphi 0, %s24
    %s41 = sphi 0, %s25
    %s45 = sphi 0, %s45
    %s47 = sphi 0, %s45
    %s48 = sphi 0, %s47
    %s62 = sphi 0, %s48
    %s66 = sphi 0, %s66
    %s68 = sphi 0, %s66
    %s69 = sphi 0, %s68
    %s83 = sphi 0, %s69
    %s87 = sphi 0, %s87
    %s89 = sphi 0, %s87
    %s90 = sphi 0, %s89
    %s104 = sphi 0, %s90
    %s108 = sphi 0, %s108
    %s110 = sphi 0, %s108
    %s111 = sphi 0, %s110
    %s125 = sphi 0, %s111
    %s131 = sphi 0, %s133
    %s134 = sphi 0, %s131
    %s135 = sphi 0, %s134
    %s151 = sphi 0, %s135
  $region4: #{tpu_custom_call.1} parent=0 // loop_header_branch
    %14 = sbr.rel (%p12) target = $region8
  $region5: #{tpu_custom_call.1} parent=0 // loop_body
    %s16 = ssub.s32 %s11, 1
    %s17 = ssub.s32 %s11, 2
    %s18 = sadd.s32 %s11, 1
    %s19 = ssub.s32 %s11, %s18
    %p20 = scmp.eq.s32.totalorder %s19, 0
    %s22 = sadd.s32 %s21, 1
    %s23 = scalar_select %p20, %s21, %s22
    %p26 = pneg %p20
    %p27 = scmp.eq.s32.totalorder %s11, 1
    %p28 = por %p26, %p27
    %p29 = scmp.ne.s32.totalorder %s21, %s24
    %p30 = scmp.eq.s32.totalorder %s11, 0
    %p31 = por %p29, %p30
    %p32 = scmp.ne.s32.totalorder %s21, %s24
    %p33 = scmp.eq.s32.totalorder %s16, 1
    %p34 = por %p32, %p33
    %p35 = scmp.ne.s32.totalorder %s24, %s25
    %p36 = scmp.eq.s32.totalorder %s16, 0
    %p37 = por %p35, %p36
    %p38 = scmp.ne.s32.totalorder %s24, %s25
    %p39 = scmp.eq.s32.totalorder %s17, 1
    %p40 = por %p38, %p39
    %p42 = scmp.ne.s32.totalorder %s25, %s41
    %p43 = scmp.eq.s32.totalorder %s17, 0
    %p44 = por %p42, %p43
    %s46 = sadd.s32 %s45, 1
    %p49 = scmp.eq.s32.totalorder %s11, 1
    %p50 = scmp.ne.s32.totalorder %s45, %s47
    %p51 = scmp.eq.s32.totalorder %s11, 0
    %p52 = por %p50, %p51
    %p53 = scmp.ne.s32.totalorder %s45, %s47
    %p54 = scmp.eq.s32.totalorder %s16, 1
    %p55 = por %p53, %p54
    %p56 = scmp.ne.s32.totalorder %s47, %s48
    %p57 = scmp.eq.s32.totalorder %s16, 0
    %p58 = por %p56, %p57
    %p59 = scmp.ne.s32.totalorder %s47, %s48
    %p60 = scmp.eq.s32.totalorder %s17, 1
    %p61 = por %p59, %p60
    %p63 = scmp.ne.s32.totalorder %s48, %s62
    %p64 = scmp.eq.s32.totalorder %s17, 0
    %p65 = por %p63, %p64
    %s67 = sadd.s32 %s66, 1
    %p70 = scmp.eq.s32.totalorder %s11, 1
    %p71 = scmp.ne.s32.totalorder %s66, %s68
    %p72 = scmp.eq.s32.totalorder %s11, 0
    %p73 = por %p71, %p72
    %p74 = scmp.ne.s32.totalorder %s66, %s68
    %p75 = scmp.eq.s32.totalorder %s16, 1
    %p76 = por %p74, %p75
    %p77 = scmp.ne.s32.totalorder %s68, %s69
    %p78 = scmp.eq.s32.totalorder %s16, 0
    %p79 = por %p77, %p78
    %p80 = scmp.ne.s32.totalorder %s68, %s69
    %p81 = scmp.eq.s32.totalorder %s17, 1
    %p82 = por %p80, %p81
    %p84 = scmp.ne.s32.totalorder %s69, %s83
    %p85 = scmp.eq.s32.totalorder %s17, 0
    %p86 = por %p84, %p85
    %s88 = sadd.s32 %s87, 1
    %p91 = scmp.eq.s32.totalorder %s11, 1
    %p92 = scmp.ne.s32.totalorder %s87, %s89
    %p93 = scmp.eq.s32.totalorder %s11, 0
    %p94 = por %p92, %p93
    %p95 = scmp.ne.s32.totalorder %s87, %s89
    %p96 = scmp.eq.s32.totalorder %s16, 1
    %p97 = por %p95, %p96
    %p98 = scmp.ne.s32.totalorder %s89, %s90
    %p99 = scmp.eq.s32.totalorder %s16, 0
    %p100 = por %p98, %p99
    %p101 = scmp.ne.s32.totalorder %s89, %s90
    %p102 = scmp.eq.s32.totalorder %s17, 1
    %p103 = por %p101, %p102
    %p105 = scmp.ne.s32.totalorder %s90, %s104
    %p106 = scmp.eq.s32.totalorder %s17, 0
    %p107 = por %p105, %p106
    %s109 = sadd.s32 %s108, 1
    %p112 = scmp.eq.s32.totalorder %s11, 1
    %p113 = scmp.ne.s32.totalorder %s108, %s110
    %p114 = scmp.eq.s32.totalorder %s11, 0
    %p115 = por %p113, %p114
    %p116 = scmp.ne.s32.totalorder %s108, %s110
    %p117 = scmp.eq.s32.totalorder %s16, 1
    %p118 = por %p116, %p117
    %p119 = scmp.ne.s32.totalorder %s110, %s111
    %p120 = scmp.eq.s32.totalorder %s16, 0
    %p121 = por %p119, %p120
    %p122 = scmp.ne.s32.totalorder %s110, %s111
    %p123 = scmp.eq.s32.totalorder %s17, 1
    %p124 = por %p122, %p123
    %p126 = scmp.ne.s32.totalorder %s111, %s125
    %p127 = scmp.eq.s32.totalorder %s17, 0
    %p128 = por %p126, %p127
    %s129 = ssub.s32 %s11, %s18
    %p130 = scmp.eq.s32.totalorder %s129, 0
    %s132 = sadd.s32 %s131, 1
    %s133 = scalar_select %p130, %s131, %s132
    %p136 = pneg %p130
    %p137 = scmp.eq.s32.totalorder %s11, 1
    %p138 = por %p136, %p137
    %p139 = scmp.ne.s32.totalorder %s131, %s134
    %p140 = scmp.eq.s32.totalorder %s11, 0
    %p141 = por %p139, %p140
    %p142 = scmp.ne.s32.totalorder %s131, %s134
    %p143 = scmp.eq.s32.totalorder %s16, 1
    %p144 = por %p142, %p143
    %p145 = scmp.ne.s32.totalorder %s134, %s135
    %p146 = scmp.eq.s32.totalorder %s16, 0
    %p147 = por %p145, %p146
    %p148 = scmp.ne.s32.totalorder %s134, %s135
    %p149 = scmp.eq.s32.totalorder %s17, 1
    %p150 = por %p148, %p149
    %p152 = scmp.ne.s32.totalorder %s135, %s151
    %p153 = scmp.eq.s32.totalorder %s17, 0
    %p154 = por %p152, %p153
    %p155 = scmp.le.s32.totalorder 1, %s11
    %p156 = scmp.lt.s32.totalorder %s11, 3
    %p157 = pnand %p155, %p156
    %p158 = pneg %p157
    // Predicated region
    $region9: #{tpu_custom_call.1} parent=5 // pred_check
      _
    $region10: #{tpu_custom_call.1} parent=5 // pred_check_branch
      %160 = sbr.rel (%p157) target = $region12
    $region11: #{tpu_custom_call.1} parent=5 // pred_region
      %s161 = ssub.s32 %s11, 1
      // Predicated region
      $region13: #{tpu_custom_call.1} parent=11 // pred_check
        %p162 = pneg %p58
      $region14: #{tpu_custom_call.1} parent=11 // pred_check_branch
        %164 = sbr.rel (%p162) target = $region16
      $region15: #{tpu_custom_call.1} parent=11 // pred_region
        _
      $region16: #{tpu_custom_call.1} parent=11 // pred_fallthru
        _
      // Predicated region
      $region17: #{tpu_custom_call.1} parent=11 // pred_check
        %p165 = pneg %p79
      $region18: #{tpu_custom_call.1} parent=11 // pred_check_branch
        %167 = sbr.rel (%p165) target = $region20
      $region19: #{tpu_custom_call.1} parent=11 // pred_region
        _
      $region20: #{tpu_custom_call.1} parent=11 // pred_fallthru
        _
      // Predicated region
      $region21: #{tpu_custom_call.1} parent=11 // pred_check
        %p168 = pneg %p100
      $region22: #{tpu_custom_call.1} parent=11 // pred_check_branch
        %170 = sbr.rel (%p168) target = $region24
      $region23: #{tpu_custom_call.1} parent=11 // pred_region
        _
      $region24: #{tpu_custom_call.1} parent=11 // pred_fallthru
        _
      // Predicated region
      $region25: #{tpu_custom_call.1} parent=11 // pred_check
        %p171 = pneg %p121
      $region26: #{tpu_custom_call.1} parent=11 // pred_check_branch
        %173 = sbr.rel (%p171) target = $region28
      $region27: #{tpu_custom_call.1} parent=11 // pred_region
        _
      $region28: #{tpu_custom_call.1} parent=11 // pred_fallthru
        _
    $region12: #{tpu_custom_call.1} parent=5 // pred_fallthru
      _
    %p174 = scmp.lt.s32.totalorder %s11, 2
    // Predicated region
    $region29: #{tpu_custom_call.1} parent=5 // pred_check
      %p175 = pneg %p174
    $region30: #{tpu_custom_call.1} parent=5 // pred_check_branch
      %177 = sbr.rel (%p175) target = $region32
    $region31: #{tpu_custom_call.1} parent=5 // pred_region
      // Predicated region
      $region33: #{tpu_custom_call.1} parent=31 // pred_check
        %p178 = pneg %p31
      $region34: #{tpu_custom_call.1} parent=31 // pred_check_branch
        %180 = sbr.rel (%p178) target = $region36
      $region35: #{tpu_custom_call.1} parent=31 // pred_region
        %s181 = smul.u32 32, %s11
        %p182 = scmp.lt.s32.totalorder %s181, 63
        %s183 = scalar_select %p182, %s181, 63
        %s184 = smul.addr %s183, 8
        %s185 = scalar_lea.vmem %s0, %s184
        %s186 = smul.u32 32, %s11
      $region36: #{tpu_custom_call.1} parent=31 // pred_fallthru
        _
    $region32: #{tpu_custom_call.1} parent=5 // pred_fallthru
      _
    %p187 = scmp.le.s32.totalorder 1, %s11
    %p188 = scmp.lt.s32.totalorder %s11, 3
    %p189 = pnand %p187, %p188
    %p190 = pneg %p189
    // Predicated region
    $region37: #{tpu_custom_call.1} parent=5 // pred_check
      _
    $region38: #{tpu_custom_call.1} parent=5 // pred_check_branch
      %192 = sbr.rel (%p189) target = $region40
    $region39: #{tpu_custom_call.1} parent=5 // pred_region
      %s193 = ssub.s32 %s11, 1
      %s194 = smul.u32 32, %s16
      %p195 = scmp.lt.s32.totalorder %s194, 63
      %s196 = scalar_select %p195, %s194, 63
      %s197 = smul.addr %s196, 8
      %s198 = scalar_lea.vmem %s0, %s197
      %p199 = pneg %p37
      %p200 = pneg %p34
      %p201 = pneg %p58
      %p202 = pneg %p55
      %p203 = pneg %p79
      %p204 = pneg %p76
      %p205 = pneg %p100
      %p206 = pneg %p97
      %p207 = pneg %p121
      %p208 = pneg %p118
      %p209 = pneg %p147
      %p210 = pneg %p144
      %s211 = smul.u32 32, %s16
      %p212 = scmp.lt.s32.totalorder %s211, 63
      %s213 = scalar_select %p212, %s211, 63
      %s214 = smul.addr %s213, 8
      %s215 = scalar_lea.vmem %s5, %s214
      %s216 = smul.u32 32, %s16
      %p217 = scmp.lt.s32.totalorder %s216, 63
      %s218 = scalar_select %p217, %s216, 63
      %s219 = smul.addr %s218, 8
      %s220 = scalar_lea.vmem %s0, %s219
      %s221 = smul.u32 32, %s16
      %s222 = smul.u32 32, %s16
      %p223 = scmp.lt.s32.totalorder %s222, 63
      %s224 = scalar_select %p223, %s222, 63
      %s225 = smul.addr %s224, 8
      %s226 = scalar_lea.vmem %s5, %s225
      %s227 = smul.u32 32, %s16
      %v228 = vld [vmem:[%s220] sm:$0xff]
      %v229 = vld [vmem:[%s220 + $0x8] sm:$0xff]
      %v230 = vld [vmem:[%s220 + $0x10] sm:$0xff]
      %v231 = vld [vmem:[%s220 + $0x18] sm:$0xff]
      %v232 = vld [vmem:[%s220 + $0x20] sm:$0xff]
      %v233 = vld [vmem:[%s220 + $0x28] sm:$0xff]
      %v234 = vld [vmem:[%s220 + $0x30] sm:$0xff]
      %v235 = vld [vmem:[%s220 + $0x38] sm:$0xff]
      %v236 = vld [vmem:[%s220 + $0x40] sm:$0xff]
      %v237 = vld [vmem:[%s220 + $0x48] sm:$0xff]
      %v238 = vld [vmem:[%s220 + $0x50] sm:$0xff]
      %v239 = vld [vmem:[%s220 + $0x58] sm:$0xff]
      %v240 = vld [vmem:[%s220 + $0x60] sm:$0xff]
      %v241 = vld [vmem:[%s220 + $0x68] sm:$0xff]
      %v242 = vld [vmem:[%s220 + $0x70] sm:$0xff]
      %v243 = vld [vmem:[%s220 + $0x78] sm:$0xff]
      %v244 = vld [vmem:[%s220 + $0x80] sm:$0xff]
      %v245 = vld [vmem:[%s220 + $0x88] sm:$0xff]
      %v246 = vld [vmem:[%s220 + $0x90] sm:$0xff]
      %v247 = vld [vmem:[%s220 + $0x98] sm:$0xff]
      %v248 = vld [vmem:[%s220 + $0xa0] sm:$0xff]
      %v249 = vld [vmem:[%s220 + $0xa8] sm:$0xff]
      %v250 = vld [vmem:[%s220 + $0xb0] sm:$0xff]
      %v251 = vld [vmem:[%s220 + $0xb8] sm:$0xff]
      %v252 = vld [vmem:[%s220 + $0xc0] sm:$0xff]
      %v253 = vld [vmem:[%s220 + $0xc8] sm:$0xff]
      %v254 = vld [vmem:[%s220 + $0xd0] sm:$0xff]
      %v255 = vld [vmem:[%s220 + $0xd8] sm:$0xff]
      %v256 = vld [vmem:[%s220 + $0xe0] sm:$0xff]
      %v257 = vld [vmem:[%s220 + $0xe8] sm:$0xff]
      %v258 = vld [vmem:[%s220 + $0xf0] sm:$0xff]
      %v259 = vld [vmem:[%s220 + $0xf8] sm:$0xff]
      %v260 = vld [vmem:[%s1] sm:$0xff]
      %v261 = vld [vmem:[%s1 + $0x8] sm:$0xff]
      %v262 = vld [vmem:[%s1 + $0x10] sm:$0xff]
      %v263 = vld [vmem:[%s1 + $0x18] sm:$0xff]
      %v264 = vld [vmem:[%s1 + $0x20] sm:$0xff]
      %v265 = vld [vmem:[%s1 + $0x28] sm:$0xff]
      %v266 = vld [vmem:[%s1 + $0x30] sm:$0xff]
      %v267 = vld [vmem:[%s1 + $0x38] sm:$0xff]
      %v268 = vld [vmem:[%s2] sm:$0x1]
      %v270 = vperm.slane %v268, 0
      %vm272 = vcmask 523264
      %v274 = vsel %vm272, %v228, 0
      %v277 = vsel %vm272, %v229, 0
      %v280 = vsel %vm272, %v230, 0
      %v283 = vsel %vm272, %v231, 0
      %v286 = vsel %vm272, %v232, 0
      %v289 = vsel %vm272, %v233, 0
      %v292 = vsel %vm272, %v234, 0
      %v295 = vsel %vm272, %v235, 0
      %v298 = vsel %vm272, %v236, 0
      %v301 = vsel %vm272, %v237, 0
      %v304 = vsel %vm272, %v238, 0
      %v307 = vsel %vm272, %v239, 0
      %v310 = vsel %vm272, %v240, 0
      %v313 = vsel %vm272, %v241, 0
      %v316 = vsel %vm272, %v242, 0
      %v319 = vsel %vm272, %v243, 0
      %v322 = vsel %vm272, %v244, 0
      %v325 = vsel %vm272, %v245, 0
      %v328 = vsel %vm272, %v246, 0
      %v331 = vsel %vm272, %v247, 0
      %v334 = vsel %vm272, %v248, 0
      %v337 = vsel %vm272, %v249, 0
      %v340 = vsel %vm272, %v250, 0
      %v343 = vsel %vm272, %v251, 0
      %v346 = vsel %vm272, %v252, 0
      %v349 = vsel %vm272, %v253, 0
      %v352 = vsel %vm272, %v254, 0
      %v355 = vsel %vm272, %v255, 0
      %v358 = vsel %vm272, %v256, 0
      %v361 = vsel %vm272, %v257, 0
      %v364 = vsel %vm272, %v258, 0
      %v367 = vsel %vm272, %v259, 0
      %369 = vmatpush.msra.mxu0 0.0
      %370 = vmatpush.msra.mxu0 0.0
      %371 = vmatpush.msra.mxu0 0.0
      %372 = vmatpush.msra.mxu0 0.0
      %373 = vmatpush.msra.mxu0 0.0
      %374 = vmatpush.msra.mxu0 0.0
      %375 = vmatpush.msra.mxu0 0.0
      %376 = vmatpush.msra.mxu0 0.0
      %377 = vmatpush.msra.mxu0 %v267
      %378 = vmatpush.msra.mxu0 %v266
      %379 = vmatpush.msra.mxu0 %v265
      %380 = vmatpush.msra.mxu0 %v264
      %381 = vmatpush.msra.mxu0 %v263
      %382 = vmatpush.msra.mxu0 %v262
      %383 = vmatpush.msra.mxu0 %v261
      %384 = vmatpush.msra.mxu0 %v260
      %385 = vmatmul.f32.gmra.mxu0 %v274
      %v386 = vpop.f32.mrf.mxu0
      %v387 = vadd.f32 %v270, %v386
      %388 = vmatmul.f32.gmra.mxu0 %v277
      %v389 = vpop.f32.mrf.mxu0
      %v390 = vadd.f32 %v270, %v389
      %391 = vmatmul.f32.gmra.mxu0 %v280
      %v392 = vpop.f32.mrf.mxu0
      %v393 = vadd.f32 %v270, %v392
      %394 = vmatmul.f32.gmra.mxu0 %v283
      %v395 = vpop.f32.mrf.mxu0
      %v396 = vadd.f32 %v270, %v395
      %397 = vmatmul.f32.gmra.mxu0 %v286
      %v398 = vpop.f32.mrf.mxu0
      %v399 = vadd.f32 %v270, %v398
      %400 = vmatmul.f32.gmra.mxu0 %v289
      %v401 = vpop.f32.mrf.mxu0
      %v402 = vadd.f32 %v270, %v401
      %403 = vmatmul.f32.gmra.mxu0 %v292
      %v404 = vpop.f32.mrf.mxu0
      %v405 = vadd.f32 %v270, %v404
      %406 = vmatmul.f32.gmra.mxu0 %v295
      %v407 = vpop.f32.mrf.mxu0
      %v408 = vadd.f32 %v270, %v407
      %409 = vmatmul.f32.gmra.mxu0 %v298
      %v410 = vpop.f32.mrf.mxu0
      %v411 = vadd.f32 %v270, %v410
      %412 = vmatmul.f32.gmra.mxu0 %v301
      %v413 = vpop.f32.mrf.mxu0
      %v414 = vadd.f32 %v270, %v413
      %415 = vmatmul.f32.gmra.mxu0 %v304
      %v416 = vpop.f32.mrf.mxu0
      %v417 = vadd.f32 %v270, %v416
      %418 = vmatmul.f32.gmra.mxu0 %v307
      %v419 = vpop.f32.mrf.mxu0
      %v420 = vadd.f32 %v270, %v419
      %421 = vmatmul.f32.gmra.mxu0 %v310
      %v422 = vpop.f32.mrf.mxu0
      %v423 = vadd.f32 %v270, %v422
      %424 = vmatmul.f32.gmra.mxu0 %v313
      %v425 = vpop.f32.mrf.mxu0
      %v426 = vadd.f32 %v270, %v425
      %427 = vmatmul.f32.gmra.mxu0 %v316
      %v428 = vpop.f32.mrf.mxu0
      %v429 = vadd.f32 %v270, %v428
      %430 = vmatmul.f32.gmra.mxu0 %v319
      %v431 = vpop.f32.mrf.mxu0
      %v432 = vadd.f32 %v270, %v431
      %433 = vmatmul.f32.gmra.mxu0 %v322
      %v434 = vpop.f32.mrf.mxu0
      %v435 = vadd.f32 %v270, %v434
      %436 = vmatmul.f32.gmra.mxu0 %v325
      %v437 = vpop.f32.mrf.mxu0
      %v438 = vadd.f32 %v270, %v437
      %439 = vmatmul.f32.gmra.mxu0 %v328
      %v440 = vpop.f32.mrf.mxu0
      %v441 = vadd.f32 %v270, %v440
      %442 = vmatmul.f32.gmra.mxu0 %v331
      %v443 = vpop.f32.mrf.mxu0
      %v444 = vadd.f32 %v270, %v443
      %445 = vmatmul.f32.gmra.mxu0 %v334
      %v446 = vpop.f32.mrf.mxu0
      %v447 = vadd.f32 %v270, %v446
      %448 = vmatmul.f32.gmra.mxu0 %v337
      %v449 = vpop.f32.mrf.mxu0
      %v450 = vadd.f32 %v270, %v449
      %451 = vmatmul.f32.gmra.mxu0 %v340
      %v452 = vpop.f32.mrf.mxu0
      %v453 = vadd.f32 %v270, %v452
      %454 = vmatmul.f32.gmra.mxu0 %v343
      %v455 = vpop.f32.mrf.mxu0
      %v456 = vadd.f32 %v270, %v455
      %457 = vmatmul.f32.gmra.mxu0 %v346
      %v458 = vpop.f32.mrf.mxu0
      %v459 = vadd.f32 %v270, %v458
      %460 = vmatmul.f32.gmra.mxu0 %v349
      %v461 = vpop.f32.mrf.mxu0
      %v462 = vadd.f32 %v270, %v461
      %463 = vmatmul.f32.gmra.mxu0 %v352
      %v464 = vpop.f32.mrf.mxu0
      %v465 = vadd.f32 %v270, %v464
      %466 = vmatmul.f32.gmra.mxu0 %v355
      %v467 = vpop.f32.mrf.mxu0
      %v468 = vadd.f32 %v270, %v467
      %469 = vmatmul.f32.gmra.mxu0 %v358
      %v470 = vpop.f32.mrf.mxu0
      %v471 = vadd.f32 %v270, %v470
      %472 = vmatmul.f32.gmra.mxu0 %v361
      %v473 = vpop.f32.mrf.mxu0
      %v474 = vadd.f32 %v270, %v473
      %475 = vmatmul.f32.gmra.mxu0 %v364
      %v476 = vpop.f32.mrf.mxu0
      %v477 = vadd.f32 %v270, %v476
      %478 = vmatmul.f32.gmra.mxu0 %v367
      %v479 = vpop.f32.mrf.mxu0
      %v480 = vadd.f32 %v270, %v479
      %481 = vdwg.mxu0
      %v482 = vmax.f32 %v387, 0.0
      %v483 = vmax.f32 %v390, 0.0
      %v484 = vmax.f32 %v393, 0.0
      %v485 = vmax.f32 %v396, 0.0
      %v486 = vmax.f32 %v399, 0.0
      %v487 = vmax.f32 %v402, 0.0
      %v488 = vmax.f32 %v405, 0.0
      %v489 = vmax.f32 %v408, 0.0
      %v490 = vmax.f32 %v411, 0.0
      %v491 = vmax.f32 %v414, 0.0
      %v492 = vmax.f32 %v417, 0.0
      %v493 = vmax.f32 %v420, 0.0
      %v494 = vmax.f32 %v423, 0.0
      %v495 = vmax.f32 %v426, 0.0
      %v496 = vmax.f32 %v429, 0.0
      %v497 = vmax.f32 %v432, 0.0
      %v498 = vmax.f32 %v435, 0.0
      %v499 = vmax.f32 %v438, 0.0
      %v500 = vmax.f32 %v441, 0.0
      %v501 = vmax.f32 %v444, 0.0
      %v502 = vmax.f32 %v447, 0.0
      %v503 = vmax.f32 %v450, 0.0
      %v504 = vmax.f32 %v453, 0.0
      %v505 = vmax.f32 %v456, 0.0
      %v506 = vmax.f32 %v459, 0.0
      %v507 = vmax.f32 %v462, 0.0
      %v508 = vmax.f32 %v465, 0.0
      %v509 = vmax.f32 %v468, 0.0
      %v510 = vmax.f32 %v471, 0.0
      %v511 = vmax.f32 %v474, 0.0
      %v512 = vmax.f32 %v477, 0.0
      %v513 = vmax.f32 %v480, 0.0
      %v514 = vld [vmem:[%s3] sm:$0xff]
      %v515 = vld [vmem:[%s3 + $0x8] sm:$0xff]
      %v516 = vld [vmem:[%s3 + $0x10] sm:$0xff]
      %v517 = vld [vmem:[%s3 + $0x18] sm:$0xff]
      %v518 = vld [vmem:[%s4] sm:$0x1]
      %v520 = vperm.slane %v518, 0
      %vm522 = vcmask 261120
      %v524 = vsel %vm522, %v482, 0
      %v527 = vsel %vm522, %v483, 0
      %v530 = vsel %vm522, %v484, 0
      %v533 = vsel %vm522, %v485, 0
      %v536 = vsel %vm522, %v486, 0
      %v539 = vsel %vm522, %v487, 0
      %v542 = vsel %vm522, %v488, 0
      %v545 = vsel %vm522, %v489, 0
      %v548 = vsel %vm522, %v490, 0
      %v551 = vsel %vm522, %v491, 0
      %v554 = vsel %vm522, %v492, 0
      %v557 = vsel %vm522, %v493, 0
      %v560 = vsel %vm522, %v494, 0
      %v563 = vsel %vm522, %v495, 0
      %v566 = vsel %vm522, %v496, 0
      %v569 = vsel %vm522, %v497, 0
      %v572 = vsel %vm522, %v498, 0
      %v575 = vsel %vm522, %v499, 0
      %v578 = vsel %vm522, %v500, 0
      %v581 = vsel %vm522, %v501, 0
      %v584 = vsel %vm522, %v502, 0
      %v587 = vsel %vm522, %v503, 0
      %v590 = vsel %vm522, %v504, 0
      %v593 = vsel %vm522, %v505, 0
      %v596 = vsel %vm522, %v506, 0
      %v599 = vsel %vm522, %v507, 0
      %v602 = vsel %vm522, %v508, 0
      %v605 = vsel %vm522, %v509, 0
      %v608 = vsel %vm522, %v510, 0
      %v611 = vsel %vm522, %v511, 0
      %v614 = vsel %vm522, %v512, 0
      %v617 = vsel %vm522, %v513, 0
      %619 = vmatpush.msra.mxu0 0.0
      %620 = vmatpush.msra.mxu0 0.0
      %621 = vmatpush.msra.mxu0 0.0
      %622 = vmatpush.msra.mxu0 0.0
      %623 = vmatpush.msra.mxu0 0.0
      %624 = vmatpush.msra.mxu0 0.0
      %625 = vmatpush.msra.mxu0 0.0
      %626 = vmatpush.msra.mxu0 0.0
      %627 = vmatpush.msra.mxu0 0.0
      %628 = vmatpush.msra.mxu0 0.0
      %629 = vmatpush.msra.mxu0 0.0
      %630 = vmatpush.msra.mxu0 0.0
      %631 = vmatpush.msra.mxu0 %v517
      %632 = vmatpush.msra.mxu0 %v516
      %633 = vmatpush.msra.mxu0 %v515
      %634 = vmatpush.msra.mxu0 %v514
      %635 = vmatmul.f32.gmra.mxu0 %v524
      %v636 = vpop.f32.mrf.mxu0
      %v637 = vadd.f32 %v520, %v636
      %638 = vmatmul.f32.gmra.mxu0 %v527
      %v639 = vpop.f32.mrf.mxu0
      %v640 = vadd.f32 %v520, %v639
      %641 = vmatmul.f32.gmra.mxu0 %v530
      %v642 = vpop.f32.mrf.mxu0
      %v643 = vadd.f32 %v520, %v642
      %644 = vmatmul.f32.gmra.mxu0 %v533
      %v645 = vpop.f32.mrf.mxu0
      %v646 = vadd.f32 %v520, %v645
      %647 = vmatmul.f32.gmra.mxu0 %v536
      %v648 = vpop.f32.mrf.mxu0
      %v649 = vadd.f32 %v520, %v648
      %650 = vmatmul.f32.gmra.mxu0 %v539
      %v651 = vpop.f32.mrf.mxu0
      %v652 = vadd.f32 %v520, %v651
      %653 = vmatmul.f32.gmra.mxu0 %v542
      %v654 = vpop.f32.mrf.mxu0
      %v655 = vadd.f32 %v520, %v654
      %656 = vmatmul.f32.gmra.mxu0 %v545
      %v657 = vpop.f32.mrf.mxu0
      %v658 = vadd.f32 %v520, %v657
      %659 = vmatmul.f32.gmra.mxu0 %v548
      %v660 = vpop.f32.mrf.mxu0
      %v661 = vadd.f32 %v520, %v660
      %662 = vmatmul.f32.gmra.mxu0 %v551
      %v663 = vpop.f32.mrf.mxu0
      %v664 = vadd.f32 %v520, %v663
      %665 = vmatmul.f32.gmra.mxu0 %v554
      %v666 = vpop.f32.mrf.mxu0
      %v667 = vadd.f32 %v520, %v666
      %668 = vmatmul.f32.gmra.mxu0 %v557
      %v669 = vpop.f32.mrf.mxu0
      %v670 = vadd.f32 %v520, %v669
      %671 = vmatmul.f32.gmra.mxu0 %v560
      %v672 = vpop.f32.mrf.mxu0
      %v673 = vadd.f32 %v520, %v672
      %674 = vmatmul.f32.gmra.mxu0 %v563
      %v675 = vpop.f32.mrf.mxu0
      %v676 = vadd.f32 %v520, %v675
      %677 = vmatmul.f32.gmra.mxu0 %v566
      %v678 = vpop.f32.mrf.mxu0
      %v679 = vadd.f32 %v520, %v678
      %680 = vmatmul.f32.gmra.mxu0 %v569
      %v681 = vpop.f32.mrf.mxu0
      %v682 = vadd.f32 %v520, %v681
      %683 = vmatmul.f32.gmra.mxu0 %v572
      %v684 = vpop.f32.mrf.mxu0
      %v685 = vadd.f32 %v520, %v684
      %686 = vmatmul.f32.gmra.mxu0 %v575
      %v687 = vpop.f32.mrf.mxu0
      %v688 = vadd.f32 %v520, %v687
      %689 = vmatmul.f32.gmra.mxu0 %v578
      %v690 = vpop.f32.mrf.mxu0
      %v691 = vadd.f32 %v520, %v690
      %692 = vmatmul.f32.gmra.mxu0 %v581
      %v693 = vpop.f32.mrf.mxu0
      %v694 = vadd.f32 %v520, %v693
      %695 = vmatmul.f32.gmra.mxu0 %v584
      %v696 = vpop.f32.mrf.mxu0
      %v697 = vadd.f32 %v520, %v696
      %698 = vmatmul.f32.gmra.mxu0 %v587
      %v699 = vpop.f32.mrf.mxu0
      %v700 = vadd.f32 %v520, %v699
      %701 = vmatmul.f32.gmra.mxu0 %v590
      %v702 = vpop.f32.mrf.mxu0
      %v703 = vadd.f32 %v520, %v702
      %704 = vmatmul.f32.gmra.mxu0 %v593
      %v705 = vpop.f32.mrf.mxu0
      %v706 = vadd.f32 %v520, %v705
      %707 = vmatmul.f32.gmra.mxu0 %v596
      %v708 = vpop.f32.mrf.mxu0
      %v709 = vadd.f32 %v520, %v708
      %710 = vmatmul.f32.gmra.mxu0 %v599
      %v711 = vpop.f32.mrf.mxu0
      %v712 = vadd.f32 %v520, %v711
      %713 = vmatmul.f32.gmra.mxu0 %v602
      %v714 = vpop.f32.mrf.mxu0
      %v715 = vadd.f32 %v520, %v714
      %716 = vmatmul.f32.gmra.mxu0 %v605
      %v717 = vpop.f32.mrf.mxu0
      %v718 = vadd.f32 %v520, %v717
      %719 = vmatmul.f32.gmra.mxu0 %v608
      %v720 = vpop.f32.mrf.mxu0
      %v721 = vadd.f32 %v520, %v720
      %722 = vmatmul.f32.gmra.mxu0 %v611
      %v723 = vpop.f32.mrf.mxu0
      %v724 = vadd.f32 %v520, %v723
      %725 = vmatmul.f32.gmra.mxu0 %v614
      %v726 = vpop.f32.mrf.mxu0
      %v727 = vadd.f32 %v520, %v726
      %728 = vmatmul.f32.gmra.mxu0 %v617
      %v729 = vpop.f32.mrf.mxu0
      %v730 = vadd.f32 %v520, %v729
      %731 = vdwg.mxu0
      %vm732 = vcmask 31744
      %733 = vst.msk [vmem:[%s226] sm:$0xff] %vm732, %v637
      %734 = vst.msk [vmem:[%s226 + $0x8] sm:$0xff] %vm732, %v640
      %735 = vst.msk [vmem:[%s226 + $0x10] sm:$0xff] %vm732, %v643
      %736 = vst.msk [vmem:[%s226 + $0x18] sm:$0xff] %vm732, %v646
      %737 = vst.msk [vmem:[%s226 + $0x20] sm:$0xff] %vm732, %v649
      %738 = vst.msk [vmem:[%s226 + $0x28] sm:$0xff] %vm732, %v652
      %739 = vst.msk [vmem:[%s226 + $0x30] sm:$0xff] %vm732, %v655
      %740 = vst.msk [vmem:[%s226 + $0x38] sm:$0xff] %vm732, %v658
      %741 = vst.msk [vmem:[%s226 + $0x40] sm:$0xff] %vm732, %v661
      %742 = vst.msk [vmem:[%s226 + $0x48] sm:$0xff] %vm732, %v664
      %743 = vst.msk [vmem:[%s226 + $0x50] sm:$0xff] %vm732, %v667
      %744 = vst.msk [vmem:[%s226 + $0x58] sm:$0xff] %vm732, %v670
      %745 = vst.msk [vmem:[%s226 + $0x60] sm:$0xff] %vm732, %v673
      %746 = vst.msk [vmem:[%s226 + $0x68] sm:$0xff] %vm732, %v676
      %747 = vst.msk [vmem:[%s226 + $0x70] sm:$0xff] %vm732, %v679
      %748 = vst.msk [vmem:[%s226 + $0x78] sm:$0xff] %vm732, %v682
      %749 = vst.msk [vmem:[%s226 + $0x80] sm:$0xff] %vm732, %v685
      %750 = vst.msk [vmem:[%s226 + $0x88] sm:$0xff] %vm732, %v688
      %751 = vst.msk [vmem:[%s226 + $0x90] sm:$0xff] %vm732, %v691
      %752 = vst.msk [vmem:[%s226 + $0x98] sm:$0xff] %vm732, %v694
      %753 = vst.msk [vmem:[%s226 + $0xa0] sm:$0xff] %vm732, %v697
      %754 = vst.msk [vmem:[%s226 + $0xa8] sm:$0xff] %vm732, %v700
      %755 = vst.msk [vmem:[%s226 + $0xb0] sm:$0xff] %vm732, %v703
      %756 = vst.msk [vmem:[%s226 + $0xb8] sm:$0xff] %vm732, %v706
      %757 = vst.msk [vmem:[%s226 + $0xc0] sm:$0xff] %vm732, %v709
      %758 = vst.msk [vmem:[%s226 + $0xc8] sm:$0xff] %vm732, %v712
      %759 = vst.msk [vmem:[%s226 + $0xd0] sm:$0xff] %vm732, %v715
      %760 = vst.msk [vmem:[%s226 + $0xd8] sm:$0xff] %vm732, %v718
      %761 = vst.msk [vmem:[%s226 + $0xe0] sm:$0xff] %vm732, %v721
      %762 = vst.msk [vmem:[%s226 + $0xe8] sm:$0xff] %vm732, %v724
      %763 = vst.msk [vmem:[%s226 + $0xf0] sm:$0xff] %vm732, %v727
      %764 = vst.msk [vmem:[%s226 + $0xf8] sm:$0xff] %vm732, %v730
      %s765 = smul.u32 32, %s16
      %p766 = scmp.lt.s32.totalorder %s765, 63
      %s767 = scalar_select %p766, %s765, 63
      %s768 = smul.addr %s767, 8
      %s769 = scalar_lea.vmem %s5, %s768
      // Predicated region
      $region41: #{tpu_custom_call.1} parent=39 // pred_check
        %p770 = pneg %p144
      $region42: #{tpu_custom_call.1} parent=39 // pred_check_branch
        %772 = sbr.rel (%p770) target = $region44
      $region43: #{tpu_custom_call.1} parent=39 // pred_region
        %s773 = smul.u32 32, %s16
      $region44: #{tpu_custom_call.1} parent=39 // pred_fallthru
        _
    $region40: #{tpu_custom_call.1} parent=5 // pred_fallthru
      _
    %p774 = scmp.le.s32.totalorder 2, %s11
    // Predicated region
    $region45: #{tpu_custom_call.1} parent=5 // pred_check
      %p775 = pneg %p774
    $region46: #{tpu_custom_call.1} parent=5 // pred_check_branch
      %777 = sbr.rel (%p775) target = $region48
    $region47: #{tpu_custom_call.1} parent=5 // pred_region
      %s778 = ssub.s32 %s11, 2
      // Predicated region
      $region49: #{tpu_custom_call.1} parent=47 // pred_check
        %p779 = pneg %p150
      $region50: #{tpu_custom_call.1} parent=47 // pred_check_branch
        %781 = sbr.rel (%p779) target = $region52
      $region51: #{tpu_custom_call.1} parent=47 // pred_region
        %s782 = smul.u32 32, %s17
        %p783 = scmp.lt.s32.totalorder %s782, 63
        %s784 = scalar_select %p783, %s782, 63
        %s785 = smul.addr %s784, 8
        %s786 = scalar_lea.vmem %s5, %s785
      $region52: #{tpu_custom_call.1} parent=47 // pred_fallthru
        _
    $region48: #{tpu_custom_call.1} parent=5 // pred_fallthru
      _
  $region6: #{tpu_custom_call.1} parent=0 // loop_footer
    %s15 = sadd.s32 1, %s11
  $region7: #{tpu_custom_call.1} parent=0 // loop_footer_branch
    %10 = sbr.rel target = $region3
  $region8: #{tpu_custom_call.1} parent=0 // loop_exit
    _

</llo_original>
